<compile_context>
chip_gen: v5e
topology: v5e:2x2
jax: 0.10.0
libtpu: 0.0.40
codegen_flags: <defaults>
</compile_context>

<pallas_src>
import jax
import jax.numpy as jnp
from jax.experimental import pallas as pl
from jax.experimental.pallas import tpu as pltpu

HIDDEN = 4  # nn.Linear(2, 4)


def xor_kernel(p_ref, x_ref, o_ref):
    # p_ref: f32[17] in SMEM, packed layout:
    #   [0:4]   w1[0, :]   (weight on x feature 0, per hidden unit)
    #   [4:8]   w1[1, :]   (weight on x feature 1, per hidden unit)
    #   [8:12]  b1
    #   [12:16] w2         (hidden -> 1)
    #   [16]    b2
    # x_ref: f32[2, Bt] in VMEM  (features on sublanes, batch on lanes)
    # o_ref: f32[1, Bt] in VMEM  (lane-dense output)
    x0 = x_ref[0:1, :]
    x1 = x_ref[1:2, :]
    y = jnp.zeros_like(x0)
    for j in range(HIDDEN):  # static unroll: pure VPU FMAs, no MXU involvement
        h = p_ref[j] * x0 + p_ref[HIDDEN + j] * x1 + p_ref[2 * HIDDEN + j]
        h = jnp.maximum(h, 0.0)                    # ReLU (layer 1)
        y = y + p_ref[3 * HIDDEN + j] * h
    o_ref[...] = jnp.maximum(y + p_ref[4 * HIDDEN], 0.0)   # bias + ReLU (layer 2)


def pack_params(w1, b1, w2, b2):
    """Pack (2,4) w1, (4,) b1, (4,) w2, (1,) b2 into one f32[17] SMEM-friendly array."""
    return jnp.concatenate(
        [w1.reshape(-1), b1.reshape(-1), w2.reshape(-1), jnp.reshape(b2, (-1,))]
    ).astype(jnp.float32)


def xor_forward(x, params, lane_tile=2048):
    """x: (B, 2) f32; params: f32[17]; returns (B, 1) f32 (same semantics as XORModel)."""
    B = x.shape[0]
    Bp = max(128, ((B + 127) // 128) * 128)          # pad batch to lane multiple
    if Bp > lane_tile:
        Bp = ((Bp + lane_tile - 1) // lane_tile) * lane_tile

    # Batch -> lane axis (lane-dense loads/stores); zero-pad to Bp lanes.
    x_t = jnp.zeros((2, Bp), jnp.float32).at[:, :B].set(x.T.astype(jnp.float32))

    cost = pl.CostEstimate(flops=29 * Bp, transcendentals=0,
                           bytes_accessed=(3 * Bp + 17) * 4)
    smem_spec = pl.BlockSpec(memory_space=pltpu.MemorySpace.SMEM)

    if Bp <= lane_tile:
        # Small batch: single kernel invocation, whole arrays resident, no grid.
        out = pl.pallas_call(
            xor_kernel,
            out_shape=jax.ShapeDtypeStruct((1, Bp), jnp.float32),
            in_specs=[smem_spec,
                      pl.BlockSpec(memory_space=pltpu.MemorySpace.VMEM)],
            out_specs=pl.BlockSpec(memory_space=pltpu.MemorySpace.VMEM),
            cost_estimate=cost,
        )(params, x_t)
    else:
        # Large batch: tile along the lane (batch) axis; "parallel" enables megacore
        # / second-TC sharding on v7x. Tiles are far below the 64 MiB v7x VMEM budget.
        out = pl.pallas_call(
            xor_kernel,
            out_shape=jax.ShapeDtypeStruct((1, Bp), jnp.float32),
            grid=(Bp // lane_tile,),
            in_specs=[smem_spec,
                      pl.BlockSpec((2, lane_tile), lambda i: (0, i))],
            out_specs=pl.BlockSpec((1, lane_tile), lambda i: (0, i)),
            compiler_params=pltpu.CompilerParams(
                dimension_semantics=("parallel",)),
            cost_estimate=cost,
        )(params, x_t)

    return out[0, :B].reshape(B, 1)


def init_params(key):
    """Deterministic init mirroring nn.Linear (uniform +-1/sqrt(fan_in))."""
    k1, k2, k3, k4 = jax.random.split(key, 4)
    bound1 = 1.0 / jnp.sqrt(2.0)
    bound2 = 1.0 / jnp.sqrt(4.0)
    w1 = jax.random.uniform(k1, (2, HIDDEN), jnp.float32, -bound1, bound1)  # (in, out)
    b1 = jax.random.uniform(k2, (HIDDEN,), jnp.float32, -bound1, bound1)
    w2 = jax.random.uniform(k3, (HIDDEN,), jnp.float32, -bound2, bound2)
    b2 = jax.random.uniform(k4, (1,), jnp.float32, -bound2, bound2)
    return w1, b1, w2, b2


if __name__ == "__main__":
    key = jax.random.PRNGKey(0)
    kx, kp = jax.random.split(key)

    batch = 8
    x = jax.random.uniform(kx, (batch, 2), jnp.float32)   # XOR-style 2-feature inputs
    w1, b1, w2, b2 = init_params(kp)
    params = pack_params(w1, b1, w2, b2)

    out = xor_forward(x, params)
    out = jax.block_until_ready(out)

    # Pure-JAX reference of the same forward pass.
    ref = jnp.maximum(
        jnp.maximum(x @ w1 + b1, 0.0) @ w2.reshape(HIDDEN, 1) + b2, 0.0)
    assert out.shape == (batch, 1)
    assert jnp.allclose(out, ref, atol=1e-5), "mismatch vs reference"

    print("KERNEL_OK")
</pallas_src>

<mosaic_0001>
module attributes {stable_mosaic.version = 11 : i64} {
  func.func @xor_kernel(%arg0: memref<17xf32, #tpu.memory_space<smem>>, %arg1: memref<2x128xf32, #tpu.memory_space<vmem>>, %arg2: memref<1x128xf32, #tpu.memory_space<vmem>>) attributes {dimension_semantics = [], scalar_prefetch = 0 : i64, scratch_operands = 0 : i64, tpu.core_type = #tpu.core_type<tc>} {
    %c0 = arith.constant 0 : index
    %c0_0 = arith.constant 0 : index
    %0 = vector.load %arg1[%c0, %c0_0] : memref<2x128xf32, #tpu.memory_space<vmem>>, vector<1x128xf32>
    %c1 = arith.constant 1 : index
    %c0_1 = arith.constant 0 : index
    %1 = vector.load %arg1[%c1, %c0_1] : memref<2x128xf32, #tpu.memory_space<vmem>>, vector<1x128xf32>
    %cst = arith.constant 0.000000e+00 : f32
    %2 = vector.broadcast %cst : f32 to vector<1x128xf32>
    %c0_2 = arith.constant 0 : index
    %3 = memref.load %arg0[%c0_2] : memref<17xf32, #tpu.memory_space<smem>>
    %4 = vector.broadcast %3 : f32 to vector<1x128xf32>
    %5 = arith.mulf %4, %0 : vector<1x128xf32>
    %c4 = arith.constant 4 : index
    %6 = memref.load %arg0[%c4] : memref<17xf32, #tpu.memory_space<smem>>
    %7 = vector.broadcast %6 : f32 to vector<1x128xf32>
    %8 = arith.mulf %7, %1 : vector<1x128xf32>
    %9 = arith.addf %5, %8 : vector<1x128xf32>
    %c8 = arith.constant 8 : index
    %10 = memref.load %arg0[%c8] : memref<17xf32, #tpu.memory_space<smem>>
    %11 = vector.broadcast %10 : f32 to vector<1x128xf32>
    %12 = arith.addf %9, %11 : vector<1x128xf32>
    %cst_3 = arith.constant 0.000000e+00 : f32
    %13 = vector.broadcast %cst_3 : f32 to vector<1x128xf32>
    %14 = arith.maximumf %12, %13 : vector<1x128xf32>
    %c12 = arith.constant 12 : index
    %15 = memref.load %arg0[%c12] : memref<17xf32, #tpu.memory_space<smem>>
    %16 = vector.broadcast %15 : f32 to vector<1x128xf32>
    %17 = arith.mulf %16, %14 : vector<1x128xf32>
    %18 = arith.addf %2, %17 : vector<1x128xf32>
    %c1_4 = arith.constant 1 : index
    %19 = memref.load %arg0[%c1_4] : memref<17xf32, #tpu.memory_space<smem>>
    %20 = vector.broadcast %19 : f32 to vector<1x128xf32>
    %21 = arith.mulf %20, %0 : vector<1x128xf32>
    %c5 = arith.constant 5 : index
    %22 = memref.load %arg0[%c5] : memref<17xf32, #tpu.memory_space<smem>>
    %23 = vector.broadcast %22 : f32 to vector<1x128xf32>
    %24 = arith.mulf %23, %1 : vector<1x128xf32>
    %25 = arith.addf %21, %24 : vector<1x128xf32>
    %c9 = arith.constant 9 : index
    %26 = memref.load %arg0[%c9] : memref<17xf32, #tpu.memory_space<smem>>
    %27 = vector.broadcast %26 : f32 to vector<1x128xf32>
    %28 = arith.addf %25, %27 : vector<1x128xf32>
    %cst_5 = arith.constant 0.000000e+00 : f32
    %29 = vector.broadcast %cst_5 : f32 to vector<1x128xf32>
    %30 = arith.maximumf %28, %29 : vector<1x128xf32>
    %c13 = arith.constant 13 : index
    %31 = memref.load %arg0[%c13] : memref<17xf32, #tpu.memory_space<smem>>
    %32 = vector.broadcast %31 : f32 to vector<1x128xf32>
    %33 = arith.mulf %32, %30 : vector<1x128xf32>
    %34 = arith.addf %18, %33 : vector<1x128xf32>
    %c2 = arith.constant 2 : index
    %35 = memref.load %arg0[%c2] : memref<17xf32, #tpu.memory_space<smem>>
    %36 = vector.broadcast %35 : f32 to vector<1x128xf32>
    %37 = arith.mulf %36, %0 : vector<1x128xf32>
    %c6 = arith.constant 6 : index
    %38 = memref.load %arg0[%c6] : memref<17xf32, #tpu.memory_space<smem>>
    %39 = vector.broadcast %38 : f32 to vector<1x128xf32>
    %40 = arith.mulf %39, %1 : vector<1x128xf32>
    %41 = arith.addf %37, %40 : vector<1x128xf32>
    %c10 = arith.constant 10 : index
    %42 = memref.load %arg0[%c10] : memref<17xf32, #tpu.memory_space<smem>>
    %43 = vector.broadcast %42 : f32 to vector<1x128xf32>
    %44 = arith.addf %41, %43 : vector<1x128xf32>
    %cst_6 = arith.constant 0.000000e+00 : f32
    %45 = vector.broadcast %cst_6 : f32 to vector<1x128xf32>
    %46 = arith.maximumf %44, %45 : vector<1x128xf32>
    %c14 = arith.constant 14 : index
    %47 = memref.load %arg0[%c14] : memref<17xf32, #tpu.memory_space<smem>>
    %48 = vector.broadcast %47 : f32 to vector<1x128xf32>
    %49 = arith.mulf %48, %46 : vector<1x128xf32>
    %50 = arith.addf %34, %49 : vector<1x128xf32>
    %c3 = arith.constant 3 : index
    %51 = memref.load %arg0[%c3] : memref<17xf32, #tpu.memory_space<smem>>
    %52 = vector.broadcast %51 : f32 to vector<1x128xf32>
    %53 = arith.mulf %52, %0 : vector<1x128xf32>
    %c7 = arith.constant 7 : index
    %54 = memref.load %arg0[%c7] : memref<17xf32, #tpu.memory_space<smem>>
    %55 = vector.broadcast %54 : f32 to vector<1x128xf32>
    %56 = arith.mulf %55, %1 : vector<1x128xf32>
    %57 = arith.addf %53, %56 : vector<1x128xf32>
    %c11 = arith.constant 11 : index
    %58 = memref.load %arg0[%c11] : memref<17xf32, #tpu.memory_space<smem>>
    %59 = vector.broadcast %58 : f32 to vector<1x128xf32>
    %60 = arith.addf %57, %59 : vector<1x128xf32>
    %cst_7 = arith.constant 0.000000e+00 : f32
    %61 = vector.broadcast %cst_7 : f32 to vector<1x128xf32>
    %62 = arith.maximumf %60, %61 : vector<1x128xf32>
    %c15 = arith.constant 15 : index
    %63 = memref.load %arg0[%c15] : memref<17xf32, #tpu.memory_space<smem>>
    %64 = vector.broadcast %63 : f32 to vector<1x128xf32>
    %65 = arith.mulf %64, %62 : vector<1x128xf32>
    %66 = arith.addf %50, %65 : vector<1x128xf32>
    %c16 = arith.constant 16 : index
    %67 = memref.load %arg0[%c16] : memref<17xf32, #tpu.memory_space<smem>>
    %68 = vector.broadcast %67 : f32 to vector<1x128xf32>
    %69 = arith.addf %66, %68 : vector<1x128xf32>
    %cst_8 = arith.constant 0.000000e+00 : f32
    %70 = vector.broadcast %cst_8 : f32 to vector<1x128xf32>
    %71 = arith.maximumf %69, %70 : vector<1x128xf32>
    %c0_9 = arith.constant 0 : index
    %c0_10 = arith.constant 0 : index
    %72 = vector.load %arg2[%c0_9, %c0_10] : memref<1x128xf32, #tpu.memory_space<vmem>>, vector<1x128xf32>
    tpu.vector_store %arg2[%c0_9, %c0_10], %71 {strides = array<i32>} : memref<1x128xf32, #tpu.memory_space<vmem>>, vector<1x128xf32>,
    return
  }
}

</mosaic_0001>

<llo_original>
// kernel: tpu_custom_call.1
$region0: #{tpu_custom_call.1}
  #allocation0 [shape = 'u32[]', space=smem, size = 0x4, offset = 0x4, fixed_abs, tag = 'smem constant byte address 0x4 - core index']
  #allocation1 [shape = 'u32[72,128]{1,0:T(1,128)}', space=vmem, size = 0x9000, scoped, tag = 'internal scratch']
  %s0 = inlined_call_operand.hbm [shape: f32[17], index: 0, kind: input, shape index: {}]
  %s1 = inlined_call_operand.hbm [shape: f32[2,128], index: 1, kind: input, shape index: {}]
  %s2 = inlined_call_operand.hbm [shape: f32[1,128], index: 2, kind: output, shape index: {}]
  %s3 = sld [smem:[#allocation0]]
  $region26: #{tpu_custom_call.1} parent=0
    _
  %s5 = ssub.s32 1, %s3
  %s6 = scalar_select 0, %s5, %s3
  $region1: #{tpu_custom_call.1} parent=0
    #allocation2 [shape = 'u8[512]{0}', space=smem, size = 0x200, scoped, tag = 'input window, operand 0, single buffered']
    #allocation3 [shape = 's32[1]{0}', space=sflag, size = 0x4, scoped, tag = 'scoped memory for tpu_custom_call.1']
    #allocation4 [shape = 's32[1]{0}', space=sflag, size = 0x4, scoped, tag = 'scoped memory for tpu_custom_call.1']
    #allocation5 [shape = 's32[1]{0}', space=sflag, size = 0x4, scoped, tag = 'scoped memory for tpu_custom_call.1']
    #allocation6 [shape = 'u8[1024]{0}', space=vmem, size = 0x400, scoped, tag = 'input window, operand 1, single buffered']
    #allocation7 [shape = 'u8[512]{0}', space=vmem, size = 0x400, scoped, tag = 'output window, operand 0, single buffered']
    %7 = vsyncpa [#allocation5], 0
    %8 = vsyncpa [#allocation3], 0
    %9 = vsyncpa [#allocation4], 0
    // Predicated region
    $region2: #{tpu_custom_call.1} parent=1 // pred_check
      _
    $region3: #{tpu_custom_call.1} parent=1 // pred_check_branch
      %11 = sbr.rel (0) target = $region5
    $region4: #{tpu_custom_call.1} parent=1 // pred_region
      %13 = vsyncadd [#allocation5], 0
      %s15 = sshll.u32 %s0, 4
      %s16 = int_to_ptr.hbm [resolvable:$true] %s15
      %18 = dma.hbm_to_smem %s16, 16, [#allocation2], [#allocation5]
    $region5: #{tpu_custom_call.1} parent=1 // pred_fallthru
      _
    // Predicated region
    $region6: #{tpu_custom_call.1} parent=1 // pred_check
      _
    $region7: #{tpu_custom_call.1} parent=1 // pred_check_branch
      %20 = sbr.rel (0) target = $region9
    $region8: #{tpu_custom_call.1} parent=1 // pred_region
      %22 = vsyncadd [#allocation3], 0
      %s24 = sshll.u32 %s1, 4
      %s25 = int_to_ptr.hbm [resolvable:$true] %s24
      %s26 = sshll.u32 [#allocation6], 4
      %s27 = int_to_ptr.vmem [resolvable:$true] %s26
      %29 = dma.hbm_to_vmem [thread:$0]  %s25, 32, %s27, [#allocation3]
    $region9: #{tpu_custom_call.1} parent=1 // pred_fallthru
      _
    // Predicated region
    $region10: #{tpu_custom_call.1} parent=1 // pred_check
      _
    $region11: #{tpu_custom_call.1} parent=1 // pred_check_branch
      %31 = sbr.rel (0) target = $region13
    $region12: #{tpu_custom_call.1} parent=1 // pred_region
      %33 = dma.done [#allocation5], 16
    $region13: #{tpu_custom_call.1} parent=1 // pred_fallthru
      _
    // Predicated region
    $region14: #{tpu_custom_call.1} parent=1 // pred_check
      _
    $region15: #{tpu_custom_call.1} parent=1 // pred_check_branch
      %35 = sbr.rel (0) target = $region17
    $region16: #{tpu_custom_call.1} parent=1 // pred_region
      %37 = dma.done [#allocation3], 32
    $region17: #{tpu_custom_call.1} parent=1 // pred_fallthru
      _
    %38 = sfence
    %v39 = vld [vmem:[#allocation6] sm:$0x1]
    %v40 = vld [vmem:[#allocation6 + $0x1] sm:$0x1]
    %s41 = sld [smem:[#allocation2]]
    %v42 = vstv %s41
    %v43 = vmul.f32 %v42, %v39
    %s44 = sld [smem:[#allocation2 + $0x4]]
    %v45 = vstv %s44
    %v46 = vmul.f32 %v45, %v40
    %v47 = vadd.f32 %v43, %v46
    %s48 = sld [smem:[#allocation2 + $0x8]]
    %v49 = vstv %s48
    %v50 = vadd.f32 %v47, %v49
    %v51 = vmax.f32 %v50, 0.0
    %s52 = sld [smem:[#allocation2 + $0xc]]
    %v53 = vstv %s52
    %v54 = vmul.f32 %v53, %v51
    %v55 = vadd.f32 %v54, 0.0
    %s56 = sld [smem:[#allocation2 + $0x1]]
    %v57 = vstv %s56
    %v58 = vmul.f32 %v57, %v39
    %s59 = sld [smem:[#allocation2 + $0x5]]
    %v60 = vstv %s59
    %v61 = vmul.f32 %v60, %v40
    %v62 = vadd.f32 %v58, %v61
    %s63 = sld [smem:[#allocation2 + $0x9]]
    %v64 = vstv %s63
    %v65 = vadd.f32 %v62, %v64
    %v66 = vmax.f32 %v65, 0.0
    %s67 = sld [smem:[#allocation2 + $0xd]]
    %v68 = vstv %s67
    %v69 = vmul.f32 %v68, %v66
    %v70 = vadd.f32 %v55, %v69
    %s71 = sld [smem:[#allocation2 + $0x2]]
    %v72 = vstv %s71
    %v73 = vmul.f32 %v72, %v39
    %s74 = sld [smem:[#allocation2 + $0x6]]
    %v75 = vstv %s74
    %v76 = vmul.f32 %v75, %v40
    %v77 = vadd.f32 %v73, %v76
    %s78 = sld [smem:[#allocation2 + $0xa]]
    %v79 = vstv %s78
    %v80 = vadd.f32 %v77, %v79
    %v81 = vmax.f32 %v80, 0.0
    %s82 = sld [smem:[#allocation2 + $0xe]]
    %v83 = vstv %s82
    %v84 = vmul.f32 %v83, %v81
    %v85 = vadd.f32 %v70, %v84
    %s86 = sld [smem:[#allocation2 + $0x3]]
    %v87 = vstv %s86
    %v88 = vmul.f32 %v87, %v39
    %s89 = sld [smem:[#allocation2 + $0x7]]
    %v90 = vstv %s89
    %v91 = vmul.f32 %v90, %v40
    %v92 = vadd.f32 %v88, %v91
    %s93 = sld [smem:[#allocation2 + $0xb]]
    %v94 = vstv %s93
    %v95 = vadd.f32 %v92, %v94
    %v96 = vmax.f32 %v95, 0.0
    %s97 = sld [smem:[#allocation2 + $0xf]]
    %v98 = vstv %s97
    %v99 = vmul.f32 %v98, %v96
    %v100 = vadd.f32 %v85, %v99
    %s101 = sld [smem:[#allocation2 + $0x10]]
    %v102 = vstv %s101
    %v103 = vadd.f32 %v100, %v102
    %v104 = vmax.f32 %v103, 0.0
    %105 = vst [vmem:[#allocation7] sm:$0x1] %v104
    // Predicated region
    $region18: #{tpu_custom_call.1} parent=1 // pred_check
      _
    $region19: #{tpu_custom_call.1} parent=1 // pred_check_branch
      %107 = sbr.rel (0) target = $region21
    $region20: #{tpu_custom_call.1} parent=1 // pred_region
      %109 = vsyncadd [#allocation4], 0
      %s111 = sshll.u32 [#allocation7], 4
      %s112 = int_to_ptr.vmem [resolvable:$true] %s111
      %s113 = sshll.u32 %s2, 4
      %s114 = int_to_ptr.hbm [resolvable:$true] %s113
      %116 = dma.vmem_to_hbm [thread:$0]  %s112, 16, %s114, [#allocation4]
    $region21: #{tpu_custom_call.1} parent=1 // pred_fallthru
      _
    // Predicated region
    $region22: #{tpu_custom_call.1} parent=1 // pred_check
      _
    $region23: #{tpu_custom_call.1} parent=1 // pred_check_branch
      %118 = sbr.rel (0) target = $region25
    $region24: #{tpu_custom_call.1} parent=1 // pred_region
      %120 = dma.done [#allocation4], 16
    $region25: #{tpu_custom_call.1} parent=1 // pred_fallthru
      _
    %121 = vsyncpa [#allocation3], 1
    %122 = vsyncpa [#allocation4], 1
    %123 = vsyncpa [#allocation5], 1

</llo_original>
